<compile_context>
chip_gen: v5e
topology: v5e:2x2
jax: 0.10.0
libtpu: 0.0.40
codegen_flags: <defaults>
</compile_context>

<pallas_src>
import jax
import jax.numpy as jnp
from jax.experimental import pallas as pl
from jax.experimental.pallas import tpu as pltpu

_TILE_BYTES = 4 << 20        # ~4 MiB per pipeline buffer (dtype-scaled rows)
_LANE_CANDIDATES = (512, 256, 128)


def _gelu_kernel(x_ref, o_ref):
    # Exact GELU: 0.5*x*(1 + erf(x/sqrt(2))), f32 compute in vregs.
    # erf via Abramowitz-Stegun 7.1.26 (max abs err 1.5e-7); exp -> EUP slot.
    x = x_ref[...].astype(jnp.float32)
    z = x * jnp.float32(0.7071067811865476)
    az = jnp.abs(z)
    t = 1.0 / (1.0 + jnp.float32(0.3275911) * az)
    poly = t * (jnp.float32(0.254829592)
                + t * (jnp.float32(-0.284496736)
                       + t * (jnp.float32(1.421413741)
                              + t * (jnp.float32(-1.453152027)
                                     + t * jnp.float32(1.061405429)))))
    erf_abs = 1.0 - poly * jnp.exp(-(az * az))          # EUP exp
    erf_z = jnp.where(z < 0, -erf_abs, erf_abs)
    y = x * (jnp.float32(0.5) + jnp.float32(0.5) * erf_z)
    o_ref[...] = y.astype(o_ref.dtype)


def gelu_hijack(x, *, min_pallas_elems=1 << 18, tile_bytes=_TILE_BYTES,
                donate_input=False):
    """Exact GELU (float32-upcast semantics) via a Pallas TPU kernel.

    For tiny activations the pallas_call launch overhead dominates, so fall
    back to jax.nn.gelu with the same upcast semantics.  Pass
    min_pallas_elems=0 to force the kernel path.  Set donate_input=True only
    if the caller's buffer may be overwritten (input_output_aliases).
    """
    total = x.size
    if total == 0:
        return x
    if total < min_pallas_elems:
        return jax.nn.gelu(x.astype(jnp.float32), approximate=False).astype(x.dtype)

    orig_shape = x.shape
    flat = x.reshape(-1)

    # Lane-dense last dim: prefer a width that divides `total` (no pad copy).
    lane = None
    for cand in _LANE_CANDIDATES:
        if total % cand == 0:
            lane = cand
            break
    if lane is None:
        lane = 128
        padded = pl.cdiv(total, lane) * lane
        flat = jnp.pad(flat, (0, padded - total))   # rare; <=127 elems of pad
    else:
        padded = total

    rows = padded // lane
    itemsize = jnp.dtype(x.dtype).itemsize

    # Dtype-aware tile rows: constant ~tile_bytes per buffer, multiple of the
    # packed-sublane count (8 f32 / 16 bf16 / 32 8-bit) unless it spans all rows.
    sublane = 8 * (4 // itemsize)
    tm_target = max(sublane,
                    (tile_bytes // (lane * itemsize)) // sublane * sublane)
    tm = rows if rows <= tm_target else tm_target
    grid = (pl.cdiv(rows, tm),)        # ragged last block is masked by Pallas

    x2d = flat.reshape(rows, lane)

    out2d = pl.pallas_call(
        _gelu_kernel,
        out_shape=jax.ShapeDtypeStruct((rows, lane), x.dtype),
        grid=grid,
        in_specs=[pl.BlockSpec((tm, lane), lambda i: (i, 0))],
        out_specs=pl.BlockSpec((tm, lane), lambda i: (i, 0)),
        compiler_params=pltpu.CompilerParams(
            # "parallel" lets v7x's two TensorCores split row-blocks; a no-op
            # on single-TC v5e/v6e.
            dimension_semantics=("parallel",),
            vmem_limit_bytes=32 << 20,     # safe on v5e/v6e (128 MiB) and v7x (64 MiB)
        ),
        cost_estimate=pl.CostEstimate(
            flops=16 * total,
            transcendentals=2 * total,
            bytes_accessed=2 * total * itemsize,
        ),
        input_output_aliases=({0: 0} if donate_input else {}),
    )(x2d)

    out = out2d.reshape(-1)
    if padded != total:
        out = out[:total]
    return out.reshape(orig_shape)


if __name__ == "__main__":
    def _ref_gelu(a):
        return jax.nn.gelu(a.astype(jnp.float32), approximate=False).astype(a.dtype)

    key = jax.random.PRNGKey(0)

    # 1) Small NCHW activation (UNet-ish), f32, force the Pallas path.
    x = jax.random.normal(key, (2, 4, 16, 16), dtype=jnp.float32)
    out = gelu_hijack(x, min_pallas_elems=0)
    jax.block_until_ready(out)
    ref = _ref_gelu(x)
    assert out.shape == x.shape and out.dtype == x.dtype
    assert jnp.max(jnp.abs(out - ref)) < 1e-5

    # 2) bf16 I/O with f32 in-vreg compute (the unet_needs_upcast branch).
    k2 = jax.random.PRNGKey(1)
    xb = jax.random.normal(k2, (4, 64, 64, 64), dtype=jnp.bfloat16)
    outb = gelu_hijack(xb, min_pallas_elems=0)
    jax.block_until_ready(outb)
    refb = _ref_gelu(xb)
    assert outb.shape == xb.shape and outb.dtype == xb.dtype
    assert jnp.max(jnp.abs(outb.astype(jnp.float32) - refb.astype(jnp.float32))) < 2e-2

    # 3) Small f32 case with a tiny tile to exercise grid > 1 and the ragged
    #    (masked) last row-block path with NO wrapper padding.
    k3 = jax.random.PRNGKey(2)
    xr = jax.random.normal(k3, (1, 8, 40, 64), dtype=jnp.float32)   # 20480 elems
    outr = gelu_hijack(xr, min_pallas_elems=0, tile_bytes=64 << 10)
    jax.block_until_ready(outr)
    refr = _ref_gelu(xr)
    assert outr.shape == xr.shape and outr.dtype == xr.dtype
    assert jnp.max(jnp.abs(outr - refr)) < 1e-5

    print("KERNEL_OK")
</pallas_src>

<mosaic_0001>
module attributes {stable_mosaic.version = 11 : i64} {
  func.func @_gelu_kernel(%arg0: i32, %arg1: memref<4x512xf32, #tpu.memory_space<vmem>>, %arg2: memref<4x512xf32, #tpu.memory_space<vmem>>) attributes {dimension_semantics = [#tpu.dimension_semantics<parallel>], iteration_bounds = array<i64: 1>, scalar_prefetch = 0 : i64, scratch_operands = 0 : i64, tpu.core_type = #tpu.core_type<tc>, window_params = [{transform_indices = @transform_0, window_bounds = array<i64: 4, 512>}, {transform_indices = @transform_1, window_bounds = array<i64: 4, 512>}]} {
    %c0 = arith.constant 0 : index
    %c0_0 = arith.constant 0 : index
    %0 = vector.load %arg1[%c0, %c0_0] : memref<4x512xf32, #tpu.memory_space<vmem>>, vector<4x512xf32>
    %cst = arith.constant 0.707106769 : f32
    %1 = vector.broadcast %cst : f32 to vector<4x512xf32>
    %2 = arith.mulf %0, %1 : vector<4x512xf32>
    %3 = math.absf %2 : vector<4x512xf32>
    %cst_1 = arith.constant 0.327591091 : f32
    %4 = vector.broadcast %cst_1 : f32 to vector<4x512xf32>
    %5 = arith.mulf %4, %3 : vector<4x512xf32>
    %cst_2 = arith.constant 1.000000e+00 : f32
    %6 = vector.broadcast %cst_2 : f32 to vector<4x512xf32>
    %7 = arith.addf %6, %5 : vector<4x512xf32>
    %cst_3 = arith.constant 1.000000e+00 : f32
    %8 = vector.broadcast %cst_3 : f32 to vector<4x512xf32>
    %9 = arith.divf %8, %7 : vector<4x512xf32>
    %cst_4 = arith.constant 1.06140542 : f32
    %10 = vector.broadcast %cst_4 : f32 to vector<4x512xf32>
    %11 = arith.mulf %9, %10 : vector<4x512xf32>
    %cst_5 = arith.constant -1.45315206 : f32
    %12 = vector.broadcast %cst_5 : f32 to vector<4x512xf32>
    %13 = arith.addf %12, %11 : vector<4x512xf32>
    %14 = arith.mulf %9, %13 : vector<4x512xf32>
    %cst_6 = arith.constant 1.42141378 : f32
    %15 = vector.broadcast %cst_6 : f32 to vector<4x512xf32>
    %16 = arith.addf %15, %14 : vector<4x512xf32>
    %17 = arith.mulf %9, %16 : vector<4x512xf32>
    %cst_7 = arith.constant -0.284496725 : f32
    %18 = vector.broadcast %cst_7 : f32 to vector<4x512xf32>
    %19 = arith.addf %18, %17 : vector<4x512xf32>
    %20 = arith.mulf %9, %19 : vector<4x512xf32>
    %cst_8 = arith.constant 0.254829586 : f32
    %21 = vector.broadcast %cst_8 : f32 to vector<4x512xf32>
    %22 = arith.addf %21, %20 : vector<4x512xf32>
    %23 = arith.mulf %9, %22 : vector<4x512xf32>
    %24 = arith.mulf %3, %3 : vector<4x512xf32>
    %cst_9 = arith.constant 0.000000e+00 : f32
    %25 = vector.broadcast %cst_9 : f32 to vector<4x512xf32>
    %26 = arith.subf %25, %24 : vector<4x512xf32>
    %27 = math.exp %26 : vector<4x512xf32>
    %28 = arith.mulf %23, %27 : vector<4x512xf32>
    %cst_10 = arith.constant 1.000000e+00 : f32
    %29 = vector.broadcast %cst_10 : f32 to vector<4x512xf32>
    %30 = arith.subf %29, %28 : vector<4x512xf32>
    %cst_11 = arith.constant 0.000000e+00 : f32
    %31 = vector.broadcast %cst_11 : f32 to vector<4x512xf32>
    %32 = arith.cmpf olt, %2, %31 : vector<4x512xf32>
    %cst_12 = arith.constant 0.000000e+00 : f32
    %33 = vector.broadcast %cst_12 : f32 to vector<4x512xf32>
    %34 = arith.subf %33, %30 : vector<4x512xf32>
    %35 = arith.select %32, %34, %30 : vector<4x512xi1>, vector<4x512xf32>
    %cst_13 = arith.constant 5.000000e-01 : f32
    %36 = vector.broadcast %cst_13 : f32 to vector<4x512xf32>
    %37 = arith.mulf %36, %35 : vector<4x512xf32>
    %cst_14 = arith.constant 5.000000e-01 : f32
    %38 = vector.broadcast %cst_14 : f32 to vector<4x512xf32>
    %39 = arith.addf %38, %37 : vector<4x512xf32>
    %40 = arith.mulf %0, %39 : vector<4x512xf32>
    %c0_15 = arith.constant 0 : index
    %c0_16 = arith.constant 0 : index
    %41 = vector.load %arg2[%c0_15, %c0_16] : memref<4x512xf32, #tpu.memory_space<vmem>>, vector<4x512xf32>
    tpu.vector_store %arg2[%c0_15, %c0_16], %40 {strides = array<i32>} : memref<4x512xf32, #tpu.memory_space<vmem>>, vector<4x512xf32>,
    return
  }
  func.func @transform_0(%arg0: i32) -> (i32, i32) {
    %c0_i32 = arith.constant 0 : i32
    %c0_i32_0 = arith.constant 0 : i32
    return %arg0, %c0_i32 : i32, i32
  }
  func.func @transform_1(%arg0: i32) -> (i32, i32) {
    %c0_i32 = arith.constant 0 : i32
    %c0_i32_0 = arith.constant 0 : i32
    return %arg0, %c0_i32 : i32, i32
  }
}

</mosaic_0001>

<llo_original>
// kernel: tpu_custom_call.1
$region0: #{tpu_custom_call.1}
  #allocation0 [shape = 'u32[]', space=smem, size = 0x4, offset = 0x4, fixed_abs, tag = 'smem constant byte address 0x4 - core index']
  #allocation1 [shape = 'u32[72,128]{1,0:T(1,128)}', space=vmem, size = 0x9000, scoped, tag = 'internal scratch']
  %s0 = inlined_call_operand.hbm [shape: f32[4,512], index: 0, kind: input, shape index: {}]
  %s1 = inlined_call_operand.hbm [shape: f32[4,512], index: 1, kind: output, shape index: {}]
  %s2 = sld [smem:[#allocation0]]
  $region18: #{tpu_custom_call.1} parent=0
    _
  %s4 = ssub.s32 1, %s2
  %s5 = scalar_select 0, %s4, %s2
  $region1: #{tpu_custom_call.1} parent=0
    #allocation2 [shape = 'u8[8192]{0}', space=vmem, size = 0x2000, scoped, tag = 'input window, operand 0, single buffered']
    #allocation3 [shape = 's32[1]{0}', space=sflag, size = 0x4, scoped, tag = 'scoped memory for tpu_custom_call.1']
    #allocation4 [shape = 's32[1]{0}', space=sflag, size = 0x4, scoped, tag = 'scoped memory for tpu_custom_call.1']
    #allocation5 [shape = 'u8[8192]{0}', space=vmem, size = 0x2000, scoped, tag = 'output window, operand 0, single buffered']
    %6 = vsyncpa [#allocation3], 0
    %7 = vsyncpa [#allocation4], 0
    // Predicated region
    $region2: #{tpu_custom_call.1} parent=1 // pred_check
      _
    $region3: #{tpu_custom_call.1} parent=1 // pred_check_branch
      %9 = sbr.rel (0) target = $region5
    $region4: #{tpu_custom_call.1} parent=1 // pred_region
      %11 = vsyncadd [#allocation3], 0
      %s13 = sshll.u32 %s0, 4
      %s14 = int_to_ptr.hbm [resolvable:$true] %s13
      %s15 = sshll.u32 [#allocation2], 4
      %s16 = int_to_ptr.vmem [resolvable:$true] %s15
      %18 = dma.hbm_to_vmem [thread:$0]  %s14, 256, %s16, [#allocation3]
    $region5: #{tpu_custom_call.1} parent=1 // pred_fallthru
      _
    // Predicated region
    $region6: #{tpu_custom_call.1} parent=1 // pred_check
      _
    $region7: #{tpu_custom_call.1} parent=1 // pred_check_branch
      %20 = sbr.rel (0) target = $region9
    $region8: #{tpu_custom_call.1} parent=1 // pred_region
      %22 = dma.done [#allocation3], 256
    $region9: #{tpu_custom_call.1} parent=1 // pred_fallthru
      _
    %v23 = vld [vmem:[#allocation2] sm:$0xff]
    %v24 = vld [vmem:[#allocation2 + $0x8] sm:$0xff]
    %v25 = vmul.f32 %v23, 0.70710677
    %v26 = vmul.f32 %v24, 0.70710677
    %v27 = vand.u32 2147483647, %v25
    %v28 = vand.u32 2147483647, %v26
    %v29 = vmul.f32 %v27, 0.3275911
    %v30 = vmul.f32 %v28, 0.3275911
    %v31 = vadd.f32 %v29, 1.0
    %v32 = vadd.f32 %v30, 1.0
    %v33 = vrcp.pop %v31
    %v34 = vmul.f32 %v31, %v33
    %v35 = vsub.f32 1.0, %v34
    %v36 = vmul.f32 %v33, %v35
    %v37 = vadd.f32 %v33, %v36
    %vm38 = vweird.f32 %v31
    %vm39 = vweird.f32 %v33
    %vm40 = vmor %vm38, %vm39
    %v41 = vsel %vm40, %v33, %v37
    %v42 = vand.u32 2147483647, %v31
    %vm43 = vcmp.eq.f32.partialorder %v42, 8.507059e+37
    %v44 = vand.u32 %v31, 2147483648
    %v45 = vor.u32 1.1754944e-38, %v44
    %v46 = vsel %vm43, %v45, %v41
    %v47 = vmul.f32 1.0, %v46
    %v48 = vrcp.pop %v32
    %v49 = vmul.f32 %v32, %v48
    %v50 = vsub.f32 1.0, %v49
    %v51 = vmul.f32 %v48, %v50
    %v52 = vadd.f32 %v48, %v51
    %vm53 = vweird.f32 %v32
    %vm54 = vweird.f32 %v48
    %vm55 = vmor %vm53, %vm54
    %v56 = vsel %vm55, %v48, %v52
    %v57 = vand.u32 2147483647, %v32
    %vm58 = vcmp.eq.f32.partialorder %v57, 8.507059e+37
    %v59 = vand.u32 %v32, 2147483648
    %v60 = vor.u32 1.1754944e-38, %v59
    %v61 = vsel %vm58, %v60, %v56
    %v62 = vmul.f32 1.0, %v61
    %v63 = vmul.f32 %v47, 1.0614054
    %v64 = vmul.f32 %v62, 1.0614054
    %v65 = vadd.f32 %v63, -1.4531521
    %v66 = vadd.f32 %v64, -1.4531521
    %v67 = vmul.f32 %v47, %v65
    %v68 = vmul.f32 %v62, %v66
    %v69 = vadd.f32 %v67, 1.4214138
    %v70 = vadd.f32 %v68, 1.4214138
    %v71 = vmul.f32 %v47, %v69
    %v72 = vmul.f32 %v62, %v70
    %v73 = vadd.f32 %v71, -0.28449672
    %v74 = vadd.f32 %v72, -0.28449672
    %v75 = vmul.f32 %v47, %v73
    %v76 = vmul.f32 %v62, %v74
    %v77 = vadd.f32 %v75, 0.2548296
    %v78 = vadd.f32 %v76, 0.2548296
    %v79 = vmul.f32 %v47, %v77
    %v80 = vmul.f32 %v62, %v78
    %v81 = vmul.f32 %v27, %v27
    %v82 = vmul.f32 %v28, %v28
    %v83 = vsub.f32 0.0, %v81
    %v84 = vsub.f32 0.0, %v82
    %v85 = vmul.f32 %v83, 1.442695
    %v86 = vpow.pop %v85
    %v87 = vmul.f32 %v84, 1.442695
    %v88 = vpow.pop %v87
    %v89 = vmul.f32 %v79, %v86
    %v90 = vmul.f32 %v80, %v88
    %v91 = vsub.f32 1.0, %v89
    %v92 = vsub.f32 1.0, %v90
    %vm93 = vcmp.lt.f32.partialorder %v25, 0.0
    %vm94 = vcmp.lt.f32.partialorder %v26, 0.0
    %v95 = vsub.f32 0.0, %v91
    %v96 = vsub.f32 0.0, %v92
    %v97 = vsel %vm93, %v95, %v91
    %v98 = vsel %vm94, %v96, %v92
    %v99 = vmul.f32 %v97, 0.5
    %v100 = vmul.f32 %v98, 0.5
    %v101 = vadd.f32 %v99, 0.5
    %v102 = vadd.f32 %v100, 0.5
    %v103 = vmul.f32 %v23, %v101
    %v104 = vmul.f32 %v24, %v102
    %105 = vst [vmem:[#allocation5] sm:$0xff] %v103
    %106 = vst [vmem:[#allocation5 + $0x8] sm:$0xff] %v104
    // Predicated region
    $region10: #{tpu_custom_call.1} parent=1 // pred_check
      _
    $region11: #{tpu_custom_call.1} parent=1 // pred_check_branch
      %108 = sbr.rel (0) target = $region13
    $region12: #{tpu_custom_call.1} parent=1 // pred_region
      %110 = vsyncadd [#allocation4], 0
      %s112 = sshll.u32 [#allocation5], 4
      %s113 = int_to_ptr.vmem [resolvable:$true] %s112
      %s114 = sshll.u32 %s1, 4
      %s115 = int_to_ptr.hbm [resolvable:$true] %s114
      %117 = dma.vmem_to_hbm [thread:$0]  %s113, 256, %s115, [#allocation4]
    $region13: #{tpu_custom_call.1} parent=1 // pred_fallthru
      _
    // Predicated region
    $region14: #{tpu_custom_call.1} parent=1 // pred_check
      _
    $region15: #{tpu_custom_call.1} parent=1 // pred_check_branch
      %119 = sbr.rel (0) target = $region17
    $region16: #{tpu_custom_call.1} parent=1 // pred_region
      %121 = dma.done [#allocation4], 256
    $region17: #{tpu_custom_call.1} parent=1 // pred_fallthru
      _
    %122 = vsyncpa [#allocation3], 1
    %123 = vsyncpa [#allocation4], 1

</llo_original>
